<compile_context>
chip_gen: v5e
topology: v5e:2x2
jax: 0.10.0
libtpu: 0.0.40
codegen_flags: <defaults>
</compile_context>

<pallas_src>
import jax
import jax.numpy as jnp
import numpy as np
from jax.experimental import pallas as pl
from jax.experimental.pallas import tpu as pltpu


def _prototype_kernel(x_ref, p_ref, psq_ref, o_ref, acc_ref, xsq_ref):
    # x_ref: (tm, tk), p_ref: (tn, tk), psq_ref: (1, tn), o_ref: (tm, tn)
    # acc_ref: (tm, tn) f32 scratch, xsq_ref: (tm, 1) f32 scratch
    k_step = pl.program_id(2)

    @pl.when(k_step == 0)
    def _():
        acc_ref[...] = jnp.zeros_like(acc_ref)
        xsq_ref[...] = jnp.zeros_like(xsq_ref)

    x = x_ref[...]
    p = p_ref[...]

    # x . p^T on the MXU, contraction on the last dims of both operands
    # (no explicit transpose of the prototype tile).
    acc_ref[...] += jax.lax.dot_general(
        x, p,
        dimension_numbers=(((1,), (1,)), ((), ())),
        preferred_element_type=jnp.float32,
    )
    # partial ||x_n||^2 over this D tile
    xsq_ref[...] += jnp.sum(x * x, axis=-1, keepdims=True)

    @pl.when(k_step == pl.num_programs(2) - 1)
    def _():
        sq_dist = xsq_ref[...] + psq_ref[...] - 2.0 * acc_ref[...]
        # distances are mathematically non-negative; clamp tiny negatives from
        # the expansion before exponentiating
        sq_dist = jnp.maximum(sq_dist, 0.0)
        o_ref[...] = jnp.exp(-sq_dist).astype(o_ref.dtype)


def _round_up(x, m):
    return ((x + m - 1) // m) * m


def prototype_forward(inputs, prototypes, *, tm=None, tn=None, tk=None):
    """inputs: (N, D), prototypes: (K, D) -> similarities (N, K) float32."""
    n, d = inputs.shape
    k, d2 = prototypes.shape
    assert d == d2

    inputs = inputs.astype(jnp.float32)
    prototypes = prototypes.astype(jnp.float32)

    # Tile sizes: lane-dense output (tn multiple of 128), sublane-aligned rows
    # (tm multiple of 8), MXU-friendly contraction tiles (tk multiple of 128).
    # Caps keep the double-buffered footprint small enough for every
    # generation's default scoped VMEM (v5e 16 MiB, v6e/v7x 32 MiB).
    if tm is None:
        tm = min(_round_up(n, 8), 256)
    if tn is None:
        tn = min(_round_up(k, 128), 256)
    if tk is None:
        tk = min(_round_up(d, 128), 512)

    n_pad = _round_up(n, tm)
    k_pad = _round_up(k, tn)
    d_pad = _round_up(d, tk)

    # Zero padding along D leaves all pairwise distances unchanged; padded
    # rows/columns of the output are sliced off below.
    x = jnp.pad(inputs, ((0, n_pad - n), (0, d_pad - d)))
    p = jnp.pad(prototypes, ((0, k_pad - k), (0, d_pad - d)))

    # ||p_k||^2 hoisted to the wrapper: computed once (not per N-tile) and
    # already laid out (1, K) so the kernel never transposes it.
    p_sq = jnp.sum(p * p, axis=-1)[None, :]

    grid = (n_pad // tm, k_pad // tn, d_pad // tk)

    out = pl.pallas_call(
        _prototype_kernel,
        out_shape=jax.ShapeDtypeStruct((n_pad, k_pad), jnp.float32),
        grid_spec=pltpu.PrefetchScalarGridSpec(
            num_scalar_prefetch=0,
            grid=grid,
            in_specs=[
                pl.BlockSpec((tm, tk), lambda i, j, kk: (i, kk)),   # x tile
                pl.BlockSpec((tn, tk), lambda i, j, kk: (j, kk)),   # p tile
                pl.BlockSpec((1, tn), lambda i, j, kk: (0, j)),     # ||p||^2
            ],
            out_specs=pl.BlockSpec((tm, tn), lambda i, j, kk: (i, j)),
            scratch_shapes=[
                pltpu.VMEM((tm, tn), jnp.float32),  # dot-product accumulator
                pltpu.VMEM((tm, 1), jnp.float32),   # ||x||^2 accumulator
            ],
        ),
        compiler_params=pltpu.CompilerParams(
            dimension_semantics=("parallel", "parallel", "arbitrary"),
        ),
        cost_estimate=pl.CostEstimate(
            flops=2 * n_pad * k_pad * d_pad,
            transcendentals=n_pad * k_pad,
            bytes_accessed=4 * (n_pad * d_pad + k_pad * d_pad + n_pad * k_pad),
        ),
    )(x, p, p_sq)

    return out[:n, :k]


def init_prototypes(key, input_size, output_size):
    """Mirrors the PyTorch init: k + (-2k) * U[0,1)  ==  U[-k, k]."""
    kval = 1.0 / np.sqrt(input_size)
    u = jax.random.uniform(key, (output_size, input_size), dtype=jnp.float32)
    return kval + (-kval - kval) * u


def reference_forward(inputs, prototypes):
    diff = inputs[:, None, :] - prototypes[None, :, :]
    sq = jnp.sum(diff * diff, axis=-1)
    return jnp.exp(-sq)


if __name__ == "__main__":
    key = jax.random.PRNGKey(0)
    k_in, k_proto, k_in2, k_proto2 = jax.random.split(key, 4)

    # --- small demo shapes matching the module's forward ---
    batch = 8          # N
    input_size = 32    # D
    output_size = 16   # K

    inputs = jax.random.normal(k_in, (batch, input_size), dtype=jnp.float32)
    prototypes = init_prototypes(k_proto, input_size, output_size)

    out = prototype_forward(inputs, prototypes)
    out = jax.block_until_ready(out)

    ref = reference_forward(inputs, prototypes)
    np.testing.assert_allclose(np.asarray(out), np.asarray(ref),
                               rtol=1e-5, atol=1e-5)

    # --- larger, non-tile-multiple shapes: exercises the 3-D grid, the D
    #     reduction loop and the wrapper padding ---
    n2, d2, k2 = 300, 700, 300
    inputs2 = 0.05 * jax.random.normal(k_in2, (n2, d2), dtype=jnp.float32)
    prototypes2 = init_prototypes(k_proto2, d2, k2)

    out2 = prototype_forward(inputs2, prototypes2)
    out2 = jax.block_until_ready(out2)

    ref2 = reference_forward(inputs2, prototypes2)
    np.testing.assert_allclose(np.asarray(out2), np.asarray(ref2),
                               rtol=2e-4, atol=1e-5)

    print("KERNEL_OK")
</pallas_src>

<mosaic_0001>
module attributes {stable_mosaic.version = 11 : i64} {
  func.func @_prototype_kernel(%arg0: i32, %arg1: i32, %arg2: i32, %arg3: memref<8x128xf32, #tpu.memory_space<vmem>>, %arg4: memref<128x128xf32, #tpu.memory_space<vmem>>, %arg5: memref<1x128xf32, #tpu.memory_space<vmem>>, %arg6: memref<8x128xf32, #tpu.memory_space<vmem>>, %arg7: memref<8x128xf32, #tpu.memory_space<vmem>>, %arg8: memref<8x1xf32, #tpu.memory_space<vmem>>) attributes {dimension_semantics = [#tpu.dimension_semantics<parallel>, #tpu.dimension_semantics<parallel>, #tpu.dimension_semantics<arbitrary>], iteration_bounds = array<i64: 1, 1, 1>, scalar_prefetch = 0 : i64, scratch_operands = 2 : i64, tpu.core_type = #tpu.core_type<tc>, window_params = [{transform_indices = @transform_0, window_bounds = array<i64: 8, 128>}, {transform_indices = @transform_1, window_bounds = array<i64: 128, 128>}, {transform_indices = @transform_2, window_bounds = array<i64: 1, 128>}, {transform_indices = @transform_3, window_bounds = array<i64: 8, 128>}]} {
    %c0_i32 = arith.constant 0 : i32
    %0 = arith.cmpi eq, %arg2, %c0_i32 : i32
    %1 = arith.extui %0 : i1 to i32
    %c0_i32_0 = arith.constant 0 : i32
    %2 = arith.cmpi ne, %1, %c0_i32_0 : i32
    scf.if %2 {
      %cst_15 = arith.constant 0.000000e+00 : f32
      %18 = vector.broadcast %cst_15 : f32 to vector<8x128xf32>
      %c0_16 = arith.constant 0 : index
      %c0_17 = arith.constant 0 : index
      %19 = vector.load %arg7[%c0_16, %c0_17] : memref<8x128xf32, #tpu.memory_space<vmem>>, vector<8x128xf32>
      tpu.vector_store %arg7[%c0_16, %c0_17], %18 {strides = array<i32>} : memref<8x128xf32, #tpu.memory_space<vmem>>, vector<8x128xf32>,
      %cst_18 = arith.constant 0.000000e+00 : f32
      %20 = vector.broadcast %cst_18 : f32 to vector<8x1xf32>
      %c0_19 = arith.constant 0 : index
      %c0_20 = arith.constant 0 : index
      %21 = vector.load %arg8[%c0_19, %c0_20] : memref<8x1xf32, #tpu.memory_space<vmem>>, vector<8x1xf32>
      tpu.vector_store %arg8[%c0_19, %c0_20], %20 {strides = array<i32>} : memref<8x1xf32, #tpu.memory_space<vmem>>, vector<8x1xf32>,
    } else {
    }
    %c0 = arith.constant 0 : index
    %c0_1 = arith.constant 0 : index
    %3 = vector.load %arg3[%c0, %c0_1] : memref<8x128xf32, #tpu.memory_space<vmem>>, vector<8x128xf32>
    %c0_2 = arith.constant 0 : index
    %c0_3 = arith.constant 0 : index
    %4 = vector.load %arg4[%c0_2, %c0_3] : memref<128x128xf32, #tpu.memory_space<vmem>>, vector<128x128xf32>
    %c0_4 = arith.constant 0 : index
    %c0_5 = arith.constant 0 : index
    %5 = vector.load %arg7[%c0_4, %c0_5] : memref<8x128xf32, #tpu.memory_space<vmem>>, vector<8x128xf32>
    %cst = arith.constant dense<0.000000e+00> : vector<8x128xf32>
    %6 = tpu.matmul %3, %4, %cst {dimension_numbers = #tpu.dot_dimension_numbers<[1], [1], [0], [0], [0, 0, 1, 0], [], []>} : vector<8x128xf32>, vector<128x128xf32>, vector<8x128xf32> -> vector<8x128xf32>
    %7 = arith.addf %5, %6 : vector<8x128xf32>
    %c0_6 = arith.constant 0 : index
    %c0_7 = arith.constant 0 : index
    %8 = vector.load %arg7[%c0_6, %c0_7] : memref<8x128xf32, #tpu.memory_space<vmem>>, vector<8x128xf32>
    tpu.vector_store %arg7[%c0_6, %c0_7], %7 {strides = array<i32>} : memref<8x128xf32, #tpu.memory_space<vmem>>, vector<8x128xf32>,
    %c0_8 = arith.constant 0 : index
    %c0_9 = arith.constant 0 : index
    %9 = vector.load %arg8[%c0_8, %c0_9] : memref<8x1xf32, #tpu.memory_space<vmem>>, vector<8x1xf32>
    %10 = arith.mulf %3, %3 : vector<8x128xf32>
    %cst_10 = arith.constant dense<0.000000e+00> : vector<8xf32>
    %11 = vector.multi_reduction <add>, %10, %cst_10 [1] : vector<8x128xf32> to vector<8xf32>
    %12 = vector.shape_cast %11 : vector<8xf32> to vector<8x1xf32>
    %13 = arith.addf %9, %12 : vector<8x1xf32>
    %c0_11 = arith.constant 0 : index
    %c0_12 = arith.constant 0 : index
    %14 = vector.load %arg8[%c0_11, %c0_12] : memref<8x1xf32, #tpu.memory_space<vmem>>, vector<8x1xf32>
    tpu.vector_store %arg8[%c0_11, %c0_12], %13 {strides = array<i32>} : memref<8x1xf32, #tpu.memory_space<vmem>>, vector<8x1xf32>,
    %c0_i32_13 = arith.constant 0 : i32
    %15 = arith.cmpi eq, %arg2, %c0_i32_13 : i32
    %16 = arith.extui %15 : i1 to i32
    %c0_i32_14 = arith.constant 0 : i32
    %17 = arith.cmpi ne, %16, %c0_i32_14 : i32
    scf.if %17 {
      %c0_15 = arith.constant 0 : index
      %c0_16 = arith.constant 0 : index
      %18 = vector.load %arg8[%c0_15, %c0_16] : memref<8x1xf32, #tpu.memory_space<vmem>>, vector<8x1xf32>
      %c0_17 = arith.constant 0 : index
      %c0_18 = arith.constant 0 : index
      %19 = vector.load %arg5[%c0_17, %c0_18] : memref<1x128xf32, #tpu.memory_space<vmem>>, vector<1x128xf32>
      %20 = vector.broadcast %18 : vector<8x1xf32> to vector<8x128xf32>
      %21 = vector.broadcast %19 : vector<1x128xf32> to vector<8x128xf32>
      %22 = arith.addf %20, %21 : vector<8x128xf32>
      %c0_19 = arith.constant 0 : index
      %c0_20 = arith.constant 0 : index
      %23 = vector.load %arg7[%c0_19, %c0_20] : memref<8x128xf32, #tpu.memory_space<vmem>>, vector<8x128xf32>
      %cst_21 = arith.constant 2.000000e+00 : f32
      %24 = vector.broadcast %cst_21 : f32 to vector<8x128xf32>
      %25 = arith.mulf %24, %23 : vector<8x128xf32>
      %26 = arith.subf %22, %25 : vector<8x128xf32>
      %cst_22 = arith.constant 0.000000e+00 : f32
      %27 = vector.broadcast %cst_22 : f32 to vector<8x128xf32>
      %28 = arith.maximumf %26, %27 : vector<8x128xf32>
      %cst_23 = arith.constant 0.000000e+00 : f32
      %29 = vector.broadcast %cst_23 : f32 to vector<8x128xf32>
      %30 = arith.subf %29, %28 : vector<8x128xf32>
      %31 = math.exp %30 : vector<8x128xf32>
      %c0_24 = arith.constant 0 : index
      %c0_25 = arith.constant 0 : index
      %32 = vector.load %arg6[%c0_24, %c0_25] : memref<8x128xf32, #tpu.memory_space<vmem>>, vector<8x128xf32>
      tpu.vector_store %arg6[%c0_24, %c0_25], %31 {strides = array<i32>} : memref<8x128xf32, #tpu.memory_space<vmem>>, vector<8x128xf32>,
    } else {
    }
    return
  }
  func.func @transform_0(%arg0: i32, %arg1: i32, %arg2: i32) -> (i32, i32) {
    %c0_i32 = arith.constant 0 : i32
    return %arg0, %arg2 : i32, i32
  }
  func.func @transform_1(%arg0: i32, %arg1: i32, %arg2: i32) -> (i32, i32) {
    %c0_i32 = arith.constant 0 : i32
    return %arg1, %arg2 : i32, i32
  }
  func.func @transform_2(%arg0: i32, %arg1: i32, %arg2: i32) -> (i32, i32) {
    %c0_i32 = arith.constant 0 : i32
    %c0_i32_0 = arith.constant 0 : i32
    return %c0_i32, %arg1 : i32, i32
  }
  func.func @transform_3(%arg0: i32, %arg1: i32, %arg2: i32) -> (i32, i32) {
    %c0_i32 = arith.constant 0 : i32
    return %arg0, %arg1 : i32, i32
  }
}

</mosaic_0001>

<llo_original>
// kernel: tpu_custom_call.1
$region0: #{tpu_custom_call.1}
  #allocation0 [shape = 'u32[]', space=smem, size = 0x4, offset = 0x4, fixed_abs, tag = 'smem constant byte address 0x4 - core index']
  #allocation1 [shape = 'u32[72,128]{1,0:T(1,128)}', space=vmem, size = 0x9000, scoped, tag = 'internal scratch']
  #allocation2 [shape = 'f32[8,128]{1,0:T(8,128)}', space=vmem, size = 0x1000, scoped, tag = 'scratch operand']
  #allocation3 [shape = 'f32[8,1]{1,0:T(8,128)}', space=vmem, size = 0x1000, scoped, tag = 'scratch operand']
  %s0 = inlined_call_operand.hbm [shape: f32[8,128], index: 0, kind: input, shape index: {}]
  %s1 = inlined_call_operand.hbm [shape: f32[128,128], index: 1, kind: input, shape index: {}]
  %s2 = inlined_call_operand.vmem [shape: f32[1,128], index: 2, kind: input, shape index: {}]
  %s3 = inlined_call_operand.hbm [shape: f32[8,128], index: 3, kind: output, shape index: {}]
  %s4 = sld [smem:[#allocation0]]
  $region38: #{tpu_custom_call.1} parent=0
    _
  %s6 = ssub.s32 1, %s4
  %s7 = scalar_select 0, %s6, %s4
  $region1: #{tpu_custom_call.1} parent=0
    #allocation4 [shape = 'u8[4096]{0}', space=vmem, size = 0x1000, scoped, tag = 'input window, operand 0, single buffered']
    #allocation5 [shape = 's32[1]{0}', space=sflag, size = 0x4, scoped, tag = 'scoped memory for tpu_custom_call.1']
    #allocation6 [shape = 's32[1]{0}', space=sflag, size = 0x4, scoped, tag = 'scoped memory for tpu_custom_call.1']
    #allocation7 [shape = 'u8[65536]{0}', space=vmem, size = 0x10000, scoped, tag = 'input window, operand 1, single buffered']
    #allocation8 [shape = 's32[1]{0}', space=sflag, size = 0x4, scoped, tag = 'scoped memory for tpu_custom_call.1']
    #allocation9 [shape = 'u8[4096]{0}', space=vmem, size = 0x1000, scoped, tag = 'output window, operand 0, single buffered']
    %8 = vsyncpa [#allocation5], 0
    %9 = vsyncpa [#allocation8], 0
    %10 = vsyncpa [#allocation6], 0
    // Predicated region
    $region2: #{tpu_custom_call.1} parent=1 // pred_check
      _
    $region3: #{tpu_custom_call.1} parent=1 // pred_check_branch
      %12 = sbr.rel (0) target = $region5
    $region4: #{tpu_custom_call.1} parent=1 // pred_region
      %14 = vsyncadd [#allocation5], 0
      %s16 = sshll.u32 %s0, 4
      %s17 = int_to_ptr.hbm [resolvable:$true] %s16
      %s18 = sshll.u32 [#allocation4], 4
      %s19 = int_to_ptr.vmem [resolvable:$true] %s18
      %21 = dma.hbm_to_vmem [thread:$0]  %s17, 128, %s19, [#allocation5]
    $region5: #{tpu_custom_call.1} parent=1 // pred_fallthru
      _
    // Predicated region
    $region6: #{tpu_custom_call.1} parent=1 // pred_check
      _
    $region7: #{tpu_custom_call.1} parent=1 // pred_check_branch
      %23 = sbr.rel (0) target = $region9
    $region8: #{tpu_custom_call.1} parent=1 // pred_region
      %25 = vsyncadd [#allocation8], 0
      %s26 = sshll.u32 %s1, 4
      %s27 = int_to_ptr.hbm [resolvable:$true] %s26
      %s28 = sshll.u32 [#allocation7], 4
      %s29 = int_to_ptr.vmem [resolvable:$true] %s28
      %34 = dma.hbm_to_vmem [thread:$0]  %s27, 2048, %s29, [#allocation8], 128, 128, 8
    $region9: #{tpu_custom_call.1} parent=1 // pred_fallthru
      _
    // Predicated region
    $region10: #{tpu_custom_call.1} parent=1 // pred_check
      _
    $region11: #{tpu_custom_call.1} parent=1 // pred_check_branch
      %36 = sbr.rel (0) target = $region13
    $region12: #{tpu_custom_call.1} parent=1 // pred_region
      _
    $region13: #{tpu_custom_call.1} parent=1 // pred_fallthru
      _
    // Predicated region
    $region14: #{tpu_custom_call.1} parent=1 // pred_check
      _
    $region15: #{tpu_custom_call.1} parent=1 // pred_check_branch
      %38 = sbr.rel (0) target = $region17
    $region16: #{tpu_custom_call.1} parent=1 // pred_region
      %40 = dma.done [#allocation5], 128
    $region17: #{tpu_custom_call.1} parent=1 // pred_fallthru
      _
    // Predicated region
    $region18: #{tpu_custom_call.1} parent=1 // pred_check
      _
    $region19: #{tpu_custom_call.1} parent=1 // pred_check_branch
      %42 = sbr.rel (0) target = $region21
    $region20: #{tpu_custom_call.1} parent=1 // pred_region
      %44 = dma.done [#allocation8], 2048
    $region21: #{tpu_custom_call.1} parent=1 // pred_fallthru
      _
    %p45 = scmp.eq.s32.totalorder 0, 0
    // Predicated region
    $region22: #{tpu_custom_call.1} parent=1 // pred_check
      %p46 = pneg %p45
    $region23: #{tpu_custom_call.1} parent=1 // pred_check_branch
      %48 = sbr.rel (%p46) target = $region25
    $region24: #{tpu_custom_call.1} parent=1 // pred_region
      %49 = vst [vmem:[#allocation2] sm:$0xff] 0.0
      %vm50 = vcmask 7168
      %51 = vst.msk [vmem:[#allocation3] sm:$0xff] %vm50, 0.0
    $region25: #{tpu_custom_call.1} parent=1 // pred_fallthru
      _
    %v52 = vld [vmem:[#allocation4] sm:$0xff]
    %v53 = vld [vmem:[#allocation7] sm:$0xff]
    %v54 = vld [vmem:[#allocation7 + $0x8] sm:$0xff]
    %v55 = vld [vmem:[#allocation7 + $0x10] sm:$0xff]
    %v56 = vld [vmem:[#allocation7 + $0x18] sm:$0xff]
    %v57 = vld [vmem:[#allocation7 + $0x20] sm:$0xff]
    %v58 = vld [vmem:[#allocation7 + $0x28] sm:$0xff]
    %v59 = vld [vmem:[#allocation7 + $0x30] sm:$0xff]
    %v60 = vld [vmem:[#allocation7 + $0x38] sm:$0xff]
    %v61 = vld [vmem:[#allocation7 + $0x40] sm:$0xff]
    %v62 = vld [vmem:[#allocation7 + $0x48] sm:$0xff]
    %v63 = vld [vmem:[#allocation7 + $0x50] sm:$0xff]
    %v64 = vld [vmem:[#allocation7 + $0x58] sm:$0xff]
    %v65 = vld [vmem:[#allocation7 + $0x60] sm:$0xff]
    %v66 = vld [vmem:[#allocation7 + $0x68] sm:$0xff]
    %v67 = vld [vmem:[#allocation7 + $0x70] sm:$0xff]
    %v68 = vld [vmem:[#allocation7 + $0x78] sm:$0xff]
    %v69 = vld [vmem:[#allocation2] sm:$0xff]
    %70 = vmatpush.xpose.msra.mxu0 %v68
    %71 = vmatpush.xpose.msra.mxu0 %v67
    %72 = vmatpush.xpose.msra.mxu0 %v66
    %73 = vmatpush.xpose.msra.mxu0 %v65
    %74 = vmatpush.xpose.msra.mxu0 %v64
    %75 = vmatpush.xpose.msra.mxu0 %v63
    %76 = vmatpush.xpose.msra.mxu0 %v62
    %77 = vmatpush.xpose.msra.mxu0 %v61
    %78 = vmatpush.xpose.msra.mxu0 %v60
    %79 = vmatpush.xpose.msra.mxu0 %v59
    %80 = vmatpush.xpose.msra.mxu0 %v58
    %81 = vmatpush.xpose.msra.mxu0 %v57
    %82 = vmatpush.xpose.msra.mxu0 %v56
    %83 = vmatpush.xpose.msra.mxu0 %v55
    %84 = vmatpush.xpose.msra.mxu0 %v54
    %85 = vmatpush.xpose.msra.mxu0 %v53
    %86 = vmatmul.f32.gmra.mxu0 %v52
    %v87 = vpop.f32.mrf.mxu0
    %v88 = vadd.f32 0.0, %v87
    %89 = vdwg.mxu0
    %v90 = vadd.f32 %v69, %v88
    %91 = vst [vmem:[#allocation2] sm:$0xff] %v90
    %v92 = vld [vmem:[#allocation3] sm:$0xff]
    %v93 = vmul.f32 %v52, %v52
    %94 = vadd.xlane.f32.xlu0 %v93
    %v95 = vpop.xlane.xlu0 %94
    %v96 = vadd.f32 %v92, %v95
    %vm97 = vcmask 7168
    %98 = vst.msk [vmem:[#allocation3] sm:$0xff] %vm97, %v96
    // Predicated region
    $region26: #{tpu_custom_call.1} parent=1 // pred_check
      %p99 = pneg %p45
    $region27: #{tpu_custom_call.1} parent=1 // pred_check_branch
      %101 = sbr.rel (%p99) target = $region29
    $region28: #{tpu_custom_call.1} parent=1 // pred_region
      %v102 = vld [vmem:[#allocation3] sm:$0xff]
      %v103 = vld [vmem:[%s2] sm:$0x1]
      %105 = vset.pattern.permute.xlu0 0
      %106 = vperm.xlu0 %105, %v102
      %v107 = vpop.permute.xlu0 %106
      %v110 = vperm.slane %v103, 0
      %v112 = vadd.f32 %v107, %v110
      %v113 = vld [vmem:[#allocation2] sm:$0xff]
      %v114 = vmul.f32 %v113, 2.0
      %v115 = vsub.f32 %v112, %v114
      %v116 = vmax.f32 %v115, 0.0
      %v117 = vsub.f32 0.0, %v116
      %v118 = vmul.f32 %v117, 1.442695
      %v119 = vpow.pop %v118
      %120 = vst [vmem:[#allocation9] sm:$0xff] %v119
    $region29: #{tpu_custom_call.1} parent=1 // pred_fallthru
      _
    // Predicated region
    $region30: #{tpu_custom_call.1} parent=1 // pred_check
      _
    $region31: #{tpu_custom_call.1} parent=1 // pred_check_branch
      %122 = sbr.rel (0) target = $region33
    $region32: #{tpu_custom_call.1} parent=1 // pred_region
      %124 = vsyncadd [#allocation6], 0
      %s126 = sshll.u32 [#allocation9], 4
      %s127 = int_to_ptr.vmem [resolvable:$true] %s126
      %s128 = sshll.u32 %s3, 4
      %s129 = int_to_ptr.hbm [resolvable:$true] %s128
      %131 = dma.vmem_to_hbm [thread:$0]  %s127, 128, %s129, [#allocation6]
    $region33: #{tpu_custom_call.1} parent=1 // pred_fallthru
      _
    // Predicated region
    $region34: #{tpu_custom_call.1} parent=1 // pred_check
      _
    $region35: #{tpu_custom_call.1} parent=1 // pred_check_branch
      %133 = sbr.rel (0) target = $region37
    $region36: #{tpu_custom_call.1} parent=1 // pred_region
      %135 = dma.done [#allocation6], 128
    $region37: #{tpu_custom_call.1} parent=1 // pred_fallthru
      _
    %136 = vsyncpa [#allocation5], 1
    %137 = vsyncpa [#allocation8], 1
    %138 = vsyncpa [#allocation6], 1

</llo_original>
